<compile_context>
chip_gen: v5e
topology: v5e:2x2
jax: 0.10.0
libtpu: 0.0.40
codegen_flags: <defaults>
</compile_context>

<pallas_src>
import functools

import jax
import jax.numpy as jnp
from jax import lax
from jax.experimental import pallas as pl
from jax.experimental.pallas import tpu as pltpu


# --------------------------------------------------------------------------- #
# Pass 1: GroupNorm statistics -> per-channel scale/shift (a_c, b_c)
# --------------------------------------------------------------------------- #
def _gn_stats_kernel(
    f_ref,        # (C, tHW)  input tile for one batch element
    gb_ref,       # (C, 2)    packed [gamma, beta]
    gmat_ref,     # (G, C)    one-hot group membership (channel -> group reduce)
    gmat_t_ref,   # (C, G)    transpose (group -> channel scatter), precomputed
    ab_ref,       # (C, 2)    output: [a_c, b_c]  (written at last HW tile)
    s_acc,        # (C, 1)    VMEM scratch: running sum over HW
    q_acc,        # (C, 1)    VMEM scratch: running sum of squares over HW
    *,
    eps: float,
    group_size: int,
    hw_total: int,
):
    j = pl.program_id(1)

    @pl.when(j == 0)
    def _():
        s_acc[...] = jnp.zeros_like(s_acc)
        q_acc[...] = jnp.zeros_like(q_acc)

    x = f_ref[...].astype(jnp.float32)                         # (C, tHW)
    s_acc[...] += jnp.sum(x, axis=-1, keepdims=True)           # (C, 1)
    q_acc[...] += jnp.sum(x * x, axis=-1, keepdims=True)       # (C, 1)

    @pl.when(j == pl.num_programs(1) - 1)
    def _():
        gmat = gmat_ref[...]                                   # (G, C)
        gsum = jnp.dot(gmat, s_acc[...],
                       preferred_element_type=jnp.float32)     # (G, 1)
        gssq = jnp.dot(gmat, q_acc[...],
                       preferred_element_type=jnp.float32)     # (G, 1)

        n = jnp.float32(group_size * hw_total)
        mean = gsum / n
        # Clamp: E[x^2] - E[x]^2 can go slightly negative (cancellation).
        var = jnp.maximum(gssq / n - mean * mean, 0.0)
        rstd = lax.rsqrt(var + jnp.float32(eps))               # (G, 1)

        # Scatter group stats back to channels (once per sample; tiny matmuls).
        gmat_t = gmat_t_ref[...]                               # (C, G)
        mean_c = jnp.dot(gmat_t, mean,
                         preferred_element_type=jnp.float32)   # (C, 1)
        rstd_c = jnp.dot(gmat_t, rstd,
                         preferred_element_type=jnp.float32)   # (C, 1)

        gamma = gb_ref[:, 0:1]
        beta = gb_ref[:, 1:2]
        a_c = rstd_c * gamma                                   # per-channel scale
        b_c = beta - mean_c * a_c                              # per-channel shift
        ab_ref[:, 0:1] = a_c
        ab_ref[:, 1:2] = b_c


# --------------------------------------------------------------------------- #
# Pass 2: normalize + fused 1x1 convs + combine, per HW tile
# --------------------------------------------------------------------------- #
def _apply_kernel(
    f_ref,        # (C, tHW)   input tile
    w_ref,        # (2C, C)    stacked [Wy; Wb]   (mxu_dtype)
    bias_ref,     # (2C, 1)    stacked [by; bb]   (f32)
    ab_ref,       # (C, 2)     per-channel [a_c, b_c]
    o_ref,        # (C, tHW)   output tile
    *,
    C: int,
    mxu_dtype,
):
    x = f_ref[...]                                             # (C, tHW)
    xf = x.astype(jnp.float32)

    # Both 1x1 convs as ONE stacked MXU matmul (f32 accumulation).
    yb = jnp.dot(w_ref[...], x.astype(mxu_dtype),
                 preferred_element_type=jnp.float32) + bias_ref[...]   # (2C, tHW)

    a_c = ab_ref[:, 0:1]                                       # (C, 1)
    b_c = ab_ref[:, 1:2]                                       # (C, 1)
    norm_f = xf * a_c + b_c                                    # fused GroupNorm

    y = yb[:C, :]                                              # conv_y(f)
    b = yb[C:, :]                                              # conv_b(f)
    o_ref[...] = (norm_f * y + b).astype(o_ref.dtype)


# --------------------------------------------------------------------------- #
# Wrapper
# --------------------------------------------------------------------------- #
def _pick_hw_tile(C: int, HW: int) -> int:
    """Largest lane tile (multiple of 128) dividing HW, with a ~20 MiB VMEM
    budget for the apply kernel's per-step working set (~7 f32 rows of C)."""
    budget_bytes = 20 * 1024 * 1024
    max_t = max(128, budget_bytes // (28 * max(C, 1)))
    for t in (2048, 1024, 512, 256, 128):
        if t <= max_t and HW % t == 0:
            return t
    # Fallback: a block equal to the full extent is always a legal BlockSpec.
    return HW


def self_spatial_norm(f_nchw, wy, by, wb, bb, gamma, beta, *,
                      num_groups=16, eps=1e-6, mxu_dtype=jnp.float32):
    """f_nchw: (N, C, H, W) float32; wy/wb: (C, C); by/bb/gamma/beta: (C,)."""
    N, C, H, W = f_nchw.shape
    HW = H * W
    assert C % num_groups == 0, "GroupNorm requires C divisible by num_groups"
    group_size = C // num_groups

    f = f_nchw.reshape(N, C, HW)

    tile = _pick_hw_tile(C, HW)
    T = HW // tile
    assert T * tile == HW

    # Packed / stacked parameters (fewer DMAs, one fused MXU matmul).
    gb = jnp.stack(
        [gamma.astype(jnp.float32), beta.astype(jnp.float32)], axis=-1)   # (C, 2)
    w_stack = jnp.concatenate([wy, wb], axis=0).astype(mxu_dtype)          # (2C, C)
    bias_stack = jnp.concatenate([by, bb], axis=0).reshape(2 * C, 1)
    bias_stack = bias_stack.astype(jnp.float32)                            # (2C, 1)

    # One-hot group membership matrices (reduce + scatter), precomputed so the
    # kernel never transposes.
    ch = jnp.arange(C, dtype=jnp.int32)
    gmat = (ch[None, :] // group_size
            == jnp.arange(num_groups, dtype=jnp.int32)[:, None]
            ).astype(jnp.float32)                                          # (G, C)
    gmat_t = gmat.T                                                        # (C, G)

    # ---- Pass 1: per-sample GroupNorm scale/shift ---------------------------
    ab = pl.pallas_call(
        functools.partial(_gn_stats_kernel, eps=eps,
                          group_size=group_size, hw_total=HW),
        out_shape=jax.ShapeDtypeStruct((N, C, 2), jnp.float32),
        grid_spec=pltpu.PrefetchScalarGridSpec(
            num_scalar_prefetch=0,
            grid=(N, T),
            in_specs=[
                pl.BlockSpec((None, C, tile), lambda n, j: (n, 0, j)),     # f
                pl.BlockSpec((C, 2), lambda n, j: (0, 0)),                 # gamma/beta
                pl.BlockSpec((num_groups, C), lambda n, j: (0, 0)),        # gmat
                pl.BlockSpec((C, num_groups), lambda n, j: (0, 0)),        # gmat^T
            ],
            out_specs=pl.BlockSpec((None, C, 2), lambda n, j: (n, 0, 0)),
            scratch_shapes=[pltpu.VMEM((C, 1), jnp.float32),
                            pltpu.VMEM((C, 1), jnp.float32)],
        ),
        compiler_params=pltpu.CompilerParams(
            dimension_semantics=("parallel", "arbitrary")),
    )(f, gb, gmat, gmat_t)

    # ---- Pass 2: normalize + stacked 1x1 convs + combine --------------------
    out = pl.pallas_call(
        functools.partial(_apply_kernel, C=C, mxu_dtype=mxu_dtype),
        out_shape=jax.ShapeDtypeStruct((N, C, HW), f.dtype),
        grid_spec=pltpu.PrefetchScalarGridSpec(
            num_scalar_prefetch=0,
            grid=(N, T),
            in_specs=[
                pl.BlockSpec((None, C, tile), lambda n, j: (n, 0, j)),     # f
                pl.BlockSpec((2 * C, C), lambda n, j: (0, 0)),             # [Wy; Wb]
                pl.BlockSpec((2 * C, 1), lambda n, j: (0, 0)),             # [by; bb]
                pl.BlockSpec((None, C, 2), lambda n, j: (n, 0, 0)),        # [a_c, b_c]
            ],
            out_specs=pl.BlockSpec((None, C, tile), lambda n, j: (n, 0, j)),
        ),
        compiler_params=pltpu.CompilerParams(
            dimension_semantics=("parallel", "parallel")),
    )(f, w_stack, bias_stack, ab)

    return out.reshape(N, C, H, W)


# --------------------------------------------------------------------------- #
# Pure-JAX reference (mirrors the PyTorch forward)
# --------------------------------------------------------------------------- #
def _reference(f, wy, by, wb, bb, gamma, beta, *, num_groups, eps=1e-6):
    N, C, H, W = f.shape
    g = num_groups
    xg = f.reshape(N, g, C // g, H, W).astype(jnp.float32)
    mean = xg.mean(axis=(2, 3, 4), keepdims=True)
    var = xg.var(axis=(2, 3, 4), keepdims=True)
    norm = ((xg - mean) / jnp.sqrt(var + eps)).reshape(N, C, H, W)
    norm = norm * gamma[None, :, None, None] + beta[None, :, None, None]
    y = jnp.einsum("oc,nchw->nohw", wy, f) + by[None, :, None, None]
    b = jnp.einsum("oc,nchw->nohw", wb, f) + bb[None, :, None, None]
    return norm * y + b


if __name__ == "__main__":
    N, C, H, W = 2, 32, 16, 16      # C must be divisible by num_groups=16
    NUM_GROUPS = 16                 # PyTorch module default

    key = jax.random.PRNGKey(0)
    k_f, k_wy, k_by, k_wb, k_bb = jax.random.split(key, 5)

    f = jax.random.normal(k_f, (N, C, H, W), dtype=jnp.float32)

    # Synthetic parameters (shapes match nn.Conv2d(C, C, 1) and GroupNorm affine).
    scale = 1.0 / jnp.sqrt(jnp.float32(C))
    wy = jax.random.uniform(k_wy, (C, C), jnp.float32, -scale, scale)  # conv_y.weight[:, :, 0, 0]
    by = jax.random.uniform(k_by, (C,), jnp.float32, -scale, scale)    # conv_y.bias
    wb = jax.random.uniform(k_wb, (C, C), jnp.float32, -scale, scale)  # conv_b.weight[:, :, 0, 0]
    bb = jax.random.uniform(k_bb, (C,), jnp.float32, -scale, scale)    # conv_b.bias
    gamma = jnp.ones((C,), jnp.float32)                                # GroupNorm.weight
    beta = jnp.zeros((C,), jnp.float32)                                # GroupNorm.bias

    out = self_spatial_norm(f, wy, by, wb, bb, gamma, beta,
                            num_groups=NUM_GROUPS, mxu_dtype=jnp.float32)
    out = jax.block_until_ready(out)
    assert out.shape == (N, C, H, W)

    ref = _reference(f, wy, by, wb, bb, gamma, beta, num_groups=NUM_GROUPS)
    err = float(jnp.max(jnp.abs(out - ref)))
    assert jnp.allclose(out, ref, atol=2e-4, rtol=2e-4), err

    print("KERNEL_OK")
</pallas_src>

<mosaic_0001>
module attributes {stable_mosaic.version = 11 : i64} {
  func.func @_gn_stats_kernel(%arg0: i32, %arg1: i32, %arg2: memref<1x32x256xf32, #tpu.memory_space<vmem>>, %arg3: memref<32x2xf32, #tpu.memory_space<vmem>>, %arg4: memref<16x32xf32, #tpu.memory_space<vmem>>, %arg5: memref<32x16xf32, #tpu.memory_space<vmem>>, %arg6: memref<1x32x2xf32, #tpu.memory_space<vmem>>, %arg7: memref<32x1xf32, #tpu.memory_space<vmem>>, %arg8: memref<32x1xf32, #tpu.memory_space<vmem>>) attributes {dimension_semantics = [#tpu.dimension_semantics<parallel>, #tpu.dimension_semantics<arbitrary>], iteration_bounds = array<i64: 2, 1>, scalar_prefetch = 0 : i64, scratch_operands = 2 : i64, tpu.core_type = #tpu.core_type<tc>, window_params = [{transform_indices = @transform_0, window_bounds = array<i64: 1, 32, 256>}, {pipeline_mode = #tpu.pipeline_mode<synchronous>, transform_indices = @transform_1, window_bounds = array<i64: 32, 2>}, {pipeline_mode = #tpu.pipeline_mode<synchronous>, transform_indices = @transform_2, window_bounds = array<i64: 16, 32>}, {pipeline_mode = #tpu.pipeline_mode<synchronous>, transform_indices = @transform_3, window_bounds = array<i64: 32, 16>}, {transform_indices = @transform_4, window_bounds = array<i64: 1, 32, 2>}]} {
    %c0_i32 = arith.constant 0 : i32
    %0 = arith.cmpi eq, %arg1, %c0_i32 : i32
    %1 = arith.extui %0 : i1 to i32
    %c0_i32_0 = arith.constant 0 : i32
    %2 = arith.cmpi ne, %1, %c0_i32_0 : i32
    scf.if %2 {
      %cst_14 = arith.constant 0.000000e+00 : f32
      %19 = vector.broadcast %cst_14 : f32 to vector<32x1xf32>
      %c0_15 = arith.constant 0 : index
      %c0_16 = arith.constant 0 : index
      %20 = vector.load %arg7[%c0_15, %c0_16] : memref<32x1xf32, #tpu.memory_space<vmem>>, vector<32x1xf32>
      tpu.vector_store %arg7[%c0_15, %c0_16], %19 {strides = array<i32>} : memref<32x1xf32, #tpu.memory_space<vmem>>, vector<32x1xf32>,
      %cst_17 = arith.constant 0.000000e+00 : f32
      %21 = vector.broadcast %cst_17 : f32 to vector<32x1xf32>
      %c0_18 = arith.constant 0 : index
      %c0_19 = arith.constant 0 : index
      %22 = vector.load %arg8[%c0_18, %c0_19] : memref<32x1xf32, #tpu.memory_space<vmem>>, vector<32x1xf32>
      tpu.vector_store %arg8[%c0_18, %c0_19], %21 {strides = array<i32>} : memref<32x1xf32, #tpu.memory_space<vmem>>, vector<32x1xf32>,
    } else {
    }
    %c0 = arith.constant 0 : index
    %c0_1 = arith.constant 0 : index
    %c0_2 = arith.constant 0 : index
    %3 = vector.load %arg2[%c0, %c0_1, %c0_2] : memref<1x32x256xf32, #tpu.memory_space<vmem>>, vector<1x32x256xf32>
    %4 = vector.shape_cast %3 : vector<1x32x256xf32> to vector<32x256xf32>
    %c0_3 = arith.constant 0 : index
    %c0_4 = arith.constant 0 : index
    %5 = vector.load %arg7[%c0_3, %c0_4] : memref<32x1xf32, #tpu.memory_space<vmem>>, vector<32x1xf32>
    %cst = arith.constant dense<0.000000e+00> : vector<32xf32>
    %6 = vector.multi_reduction <add>, %4, %cst [1] : vector<32x256xf32> to vector<32xf32>
    %7 = vector.shape_cast %6 : vector<32xf32> to vector<32x1xf32>
    %8 = arith.addf %5, %7 : vector<32x1xf32>
    %c0_5 = arith.constant 0 : index
    %c0_6 = arith.constant 0 : index
    %9 = vector.load %arg7[%c0_5, %c0_6] : memref<32x1xf32, #tpu.memory_space<vmem>>, vector<32x1xf32>
    tpu.vector_store %arg7[%c0_5, %c0_6], %8 {strides = array<i32>} : memref<32x1xf32, #tpu.memory_space<vmem>>, vector<32x1xf32>,
    %c0_7 = arith.constant 0 : index
    %c0_8 = arith.constant 0 : index
    %10 = vector.load %arg8[%c0_7, %c0_8] : memref<32x1xf32, #tpu.memory_space<vmem>>, vector<32x1xf32>
    %11 = arith.mulf %4, %4 : vector<32x256xf32>
    %cst_9 = arith.constant dense<0.000000e+00> : vector<32xf32>
    %12 = vector.multi_reduction <add>, %11, %cst_9 [1] : vector<32x256xf32> to vector<32xf32>
    %13 = vector.shape_cast %12 : vector<32xf32> to vector<32x1xf32>
    %14 = arith.addf %10, %13 : vector<32x1xf32>
    %c0_10 = arith.constant 0 : index
    %c0_11 = arith.constant 0 : index
    %15 = vector.load %arg8[%c0_10, %c0_11] : memref<32x1xf32, #tpu.memory_space<vmem>>, vector<32x1xf32>
    tpu.vector_store %arg8[%c0_10, %c0_11], %14 {strides = array<i32>} : memref<32x1xf32, #tpu.memory_space<vmem>>, vector<32x1xf32>,
    %c0_i32_12 = arith.constant 0 : i32
    %16 = arith.cmpi eq, %arg1, %c0_i32_12 : i32
    %17 = arith.extui %16 : i1 to i32
    %c0_i32_13 = arith.constant 0 : i32
    %18 = arith.cmpi ne, %17, %c0_i32_13 : i32
    scf.if %18 {
      %c0_14 = arith.constant 0 : index
      %c0_15 = arith.constant 0 : index
      %19 = vector.load %arg4[%c0_14, %c0_15] : memref<16x32xf32, #tpu.memory_space<vmem>>, vector<16x32xf32>
      %c0_16 = arith.constant 0 : index
      %c0_17 = arith.constant 0 : index
      %20 = vector.load %arg7[%c0_16, %c0_17] : memref<32x1xf32, #tpu.memory_space<vmem>>, vector<32x1xf32>
      %cst_18 = arith.constant dense<0.000000e+00> : vector<16x1xf32>
      %21 = tpu.matmul %19, %20, %cst_18 {dimension_numbers = #tpu.dot_dimension_numbers<[1], [0], [0], [1], [0, 0, 1, 1], [], []>} : vector<16x32xf32>, vector<32x1xf32>, vector<16x1xf32> -> vector<16x1xf32>
      %c0_19 = arith.constant 0 : index
      %c0_20 = arith.constant 0 : index
      %22 = vector.load %arg8[%c0_19, %c0_20] : memref<32x1xf32, #tpu.memory_space<vmem>>, vector<32x1xf32>
      %cst_21 = arith.constant dense<0.000000e+00> : vector<16x1xf32>
      %23 = tpu.matmul %19, %22, %cst_21 {dimension_numbers = #tpu.dot_dimension_numbers<[1], [0], [0], [1], [0, 0, 1, 1], [], []>} : vector<16x32xf32>, vector<32x1xf32>, vector<16x1xf32> -> vector<16x1xf32>
      %cst_22 = arith.constant 5.120000e+02 : f32
      %24 = vector.broadcast %cst_22 : f32 to vector<16x1xf32>
      %25 = arith.divf %21, %24 : vector<16x1xf32>
      %cst_23 = arith.constant 5.120000e+02 : f32
      %26 = vector.broadcast %cst_23 : f32 to vector<16x1xf32>
      %27 = arith.divf %23, %26 : vector<16x1xf32>
      %28 = arith.mulf %25, %25 : vector<16x1xf32>
      %29 = arith.subf %27, %28 : vector<16x1xf32>
      %cst_24 = arith.constant 0.000000e+00 : f32
      %30 = vector.broadcast %cst_24 : f32 to vector<16x1xf32>
      %31 = arith.maximumf %29, %30 : vector<16x1xf32>
      %cst_25 = arith.constant 9.99999997E-7 : f32
      %32 = vector.broadcast %cst_25 : f32 to vector<16x1xf32>
      %33 = arith.addf %31, %32 : vector<16x1xf32>
      %34 = math.rsqrt %33 : vector<16x1xf32>
      %c0_26 = arith.constant 0 : index
      %c0_27 = arith.constant 0 : index
      %35 = vector.load %arg5[%c0_26, %c0_27] : memref<32x16xf32, #tpu.memory_space<vmem>>, vector<32x16xf32>
      %cst_28 = arith.constant dense<0.000000e+00> : vector<32x1xf32>
      %36 = tpu.matmul %35, %25, %cst_28 {dimension_numbers = #tpu.dot_dimension_numbers<[1], [0], [0], [1], [0, 0, 1, 1], [], []>} : vector<32x16xf32>, vector<16x1xf32>, vector<32x1xf32> -> vector<32x1xf32>
      %cst_29 = arith.constant dense<0.000000e+00> : vector<32x1xf32>
      %37 = tpu.matmul %35, %34, %cst_29 {dimension_numbers = #tpu.dot_dimension_numbers<[1], [0], [0], [1], [0, 0, 1, 1], [], []>} : vector<32x16xf32>, vector<16x1xf32>, vector<32x1xf32> -> vector<32x1xf32>
      %c0_30 = arith.constant 0 : index
      %c0_31 = arith.constant 0 : index
      %38 = vector.load %arg3[%c0_30, %c0_31] : memref<32x2xf32, #tpu.memory_space<vmem>>, vector<32x1xf32>
      %c0_32 = arith.constant 0 : index
      %c1 = arith.constant 1 : index
      %39 = vector.load %arg3[%c0_32, %c1] : memref<32x2xf32, #tpu.memory_space<vmem>>, vector<32x1xf32>
      %40 = arith.mulf %37, %38 : vector<32x1xf32>
      %41 = arith.mulf %36, %40 : vector<32x1xf32>
      %42 = arith.subf %39, %41 : vector<32x1xf32>
      %c0_33 = arith.constant 0 : index
      %c0_34 = arith.constant 0 : index
      %c0_35 = arith.constant 0 : index
      %43 = vector.load %arg6[%c0_33, %c0_34, %c0_35] : memref<1x32x2xf32, #tpu.memory_space<vmem>>, vector<1x32x1xf32>
      %44 = vector.shape_cast %43 : vector<1x32x1xf32> to vector<32x1xf32>
      %45 = vector.shape_cast %40 : vector<32x1xf32> to vector<1x32x1xf32>
      tpu.vector_store %arg6[%c0_33, %c0_34, %c0_35], %45 {strides = array<i32>} : memref<1x32x2xf32, #tpu.memory_space<vmem>>, vector<1x32x1xf32>,
      %c0_36 = arith.constant 0 : index
      %c0_37 = arith.constant 0 : index
      %c1_38 = arith.constant 1 : index
      %46 = vector.load %arg6[%c0_36, %c0_37, %c1_38] : memref<1x32x2xf32, #tpu.memory_space<vmem>>, vector<1x32x1xf32>
      %47 = vector.shape_cast %46 : vector<1x32x1xf32> to vector<32x1xf32>
      %48 = vector.shape_cast %42 : vector<32x1xf32> to vector<1x32x1xf32>
      tpu.vector_store %arg6[%c0_36, %c0_37, %c1_38], %48 {strides = array<i32>} : memref<1x32x2xf32, #tpu.memory_space<vmem>>, vector<1x32x1xf32>,
    } else {
    }
    return
  }
  func.func @transform_0(%arg0: i32, %arg1: i32) -> (i32, i32, i32) {
    %c0_i32 = arith.constant 0 : i32
    %c0_i32_0 = arith.constant 0 : i32
    return %arg0, %c0_i32, %arg1 : i32, i32, i32
  }
  func.func @transform_1(%arg0: i32, %arg1: i32) -> (i32, i32) {
    %c0_i32 = arith.constant 0 : i32
    %c0_i32_0 = arith.constant 0 : i32
    %c0_i32_1 = arith.constant 0 : i32
    return %c0_i32, %c0_i32_0 : i32, i32
  }
  func.func @transform_2(%arg0: i32, %arg1: i32) -> (i32, i32) {
    %c0_i32 = arith.constant 0 : i32
    %c0_i32_0 = arith.constant 0 : i32
    %c0_i32_1 = arith.constant 0 : i32
    return %c0_i32, %c0_i32_0 : i32, i32
  }
  func.func @transform_3(%arg0: i32, %arg1: i32) -> (i32, i32) {
    %c0_i32 = arith.constant 0 : i32
    %c0_i32_0 = arith.constant 0 : i32
    %c0_i32_1 = arith.constant 0 : i32
    return %c0_i32, %c0_i32_0 : i32, i32
  }
  func.func @transform_4(%arg0: i32, %arg1: i32) -> (i32, i32, i32) {
    %c0_i32 = arith.constant 0 : i32
    %c0_i32_0 = arith.constant 0 : i32
    %c0_i32_1 = arith.constant 0 : i32
    return %arg0, %c0_i32, %c0_i32_0 : i32, i32, i32
  }
}

</mosaic_0001>

<llo_original>
// kernel: tpu_custom_call.1
$region0: #{tpu_custom_call.1}
  #allocation0 [shape = 'u32[]', space=smem, size = 0x4, offset = 0x4, fixed_abs, tag = 'smem constant byte address 0x4 - core index']
  #allocation1 [shape = 'u32[72,128]{1,0:T(1,128)}', space=vmem, size = 0x9000, scoped, tag = 'internal scratch']
  #allocation2 [shape = 'f32[32,1]{1,0:T(8,128)}', space=vmem, size = 0x4000, scoped, tag = 'scratch operand']
  #allocation3 [shape = 'f32[32,1]{1,0:T(8,128)}', space=vmem, size = 0x4000, scoped, tag = 'scratch operand']
  %s0 = inlined_call_operand.hbm [shape: f32[2,32,256], index: 0, kind: input, shape index: {}]
  %s1 = inlined_call_operand.vmem [shape: f32[32,2], index: 1, kind: input, shape index: {}]
  %s2 = inlined_call_operand.vmem [shape: f32[16,32], index: 2, kind: input, shape index: {}]
  %s3 = inlined_call_operand.vmem [shape: f32[32,16], index: 3, kind: input, shape index: {}]
  %s4 = inlined_call_operand.vmem [shape: f32[2,32,2], index: 4, kind: output, shape index: {}]
  %s5 = sld [smem:[#allocation0]]
  $region61: #{tpu_custom_call.1} parent=0
    _
  %s7 = ssub.s32 1, %s5
  %s8 = scalar_select 0, %s7, %s5
  $region1: #{tpu_custom_call.1} parent=0
    #allocation4 [shape = 'u8[65536]{0}', space=vmem, size = 0x10000, scoped, tag = 'input window, operand 0']
    #allocation5 [shape = 's32[2]{0}', space=sflag, size = 0x8, scoped, tag = 'scoped memory for tpu_custom_call.1']
    %9 = vsyncpa [#allocation5], 0
    %s10 = scalar_lea.sflag [#allocation5], 1
    %11 = vsyncpa %s10, 0
    loop: start=0, step=1, limit=4
    $region2: #{tpu_custom_call.1} parent=1 // loop_pre_header
      _
    $region3: #{tpu_custom_call.1} parent=1 // loop_header
      %s13 = sphi 0, %s17
      %p14 = scmp.ge.s32.totalorder %s13, 4
      %s20 = sphi 0, %s32
      %s21 = sphi 0, %s28
      %s22 = sphi 0, %s20
      %s23 = sphi 0, %s21
      %s24 = sphi 0, %s22
      %s25 = sphi 0, %s23
      %s37 = sphi 0, %s39
      %s40 = sphi 0, %s37
      %s41 = sphi 0, %s40
      %s57 = sphi 0, %s41
      %s61 = sphi 0, %s61
      %s63 = sphi 0, %s61
      %s64 = sphi 0, %s63
      %s78 = sphi 0, %s64
      %s82 = sphi 0, %s82
      %s84 = sphi 0, %s82
      %s85 = sphi 0, %s84
      %s99 = sphi 0, %s85
      %s103 = sphi 0, %s103
      %s105 = sphi 0, %s103
      %s106 = sphi 0, %s105
      %s120 = sphi 0, %s106
      %s126 = sphi 0, %s128
      %s129 = sphi 0, %s126
      %s130 = sphi 0, %s129
      %s146 = sphi 0, %s130
    $region4: #{tpu_custom_call.1} parent=1 // loop_header_branch
      %16 = sbr.rel (%p14) target = $region8
    $region5: #{tpu_custom_call.1} parent=1 // loop_body
      %s18 = ssub.s32 %s13, 1
      %s19 = ssub.s32 %s13, 2
      %s26 = sadd.s32 1, %s21
      %p27 = scmp.ge.s32.totalorder %s26, 1
      %s28 = scalar_select %p27, 0, %s26
      %s29 = sadd.s32 1, %s20
      %s30 = scalar_select %p27, %s29, %s20
      %p31 = scmp.ge.s32.totalorder %s30, 2
      %s32 = scalar_select %p31, 0, %s30
      %s33 = ssub.s32 %s20, %s32
      %s34 = ssub.s32 %s21, %s28
      %s35 = sor.u32 %s33, %s34
      %p36 = scmp.eq.s32.totalorder %s35, 0
      %s38 = sadd.s32 %s37, 1
      %s39 = scalar_select %p36, %s37, %s38
      %p42 = pneg %p36
      %p43 = scmp.eq.s32.totalorder %s13, 1
      %p44 = por %p42, %p43
      %p45 = scmp.ne.s32.totalorder %s37, %s40
      %p46 = scmp.eq.s32.totalorder %s13, 0
      %p47 = por %p45, %p46
      %p48 = scmp.ne.s32.totalorder %s37, %s40
      %p49 = scmp.eq.s32.totalorder %s18, 1
      %p50 = por %p48, %p49
      %p51 = scmp.ne.s32.totalorder %s40, %s41
      %p52 = scmp.eq.s32.totalorder %s18, 0
      %p53 = por %p51, %p52
      %p54 = scmp.ne.s32.totalorder %s40, %s41
      %p55 = scmp.eq.s32.totalorder %s19, 1
      %p56 = por %p54, %p55
      %p58 = scmp.ne.s32.totalorder %s41, %s57
      %p59 = scmp.eq.s32.totalorder %s19, 0
      %p60 = por %p58, %p59
      %s62 = sadd.s32 %s61, 1
      %p65 = scmp.eq.s32.totalorder %s13, 1
      %p66 = scmp.ne.s32.totalorder %s61, %s63
      %p67 = scmp.eq.s32.totalorder %s13, 0
      %p68 = por %p66, %p67
      %p69 = scmp.ne.s32.totalorder %s61, %s63
      %p70 = scmp.eq.s32.totalorder %s18, 1
      %p71 = por %p69, %p70
      %p72 = scmp.ne.s32.totalorder %s63, %s64
      %p73 = scmp.eq.s32.totalorder %s18, 0
      %p74 = por %p72, %p73
      %p75 = scmp.ne.s32.totalorder %s63, %s64
      %p76 = scmp.eq.s32.totalorder %s19, 1
      %p77 = por %p75, %p76
      %p79 = scmp.ne.s32.totalorder %s64, %s78
      %p80 = scmp.eq.s32.totalorder %s19, 0
      %p81 = por %p79, %p80
      %s83 = sadd.s32 %s82, 1
      %p86 = scmp.eq.s32.totalorder %s13, 1
      %p87 = scmp.ne.s32.totalorder %s82, %s84
      %p88 = scmp.eq.s32.totalorder %s13, 0
      %p89 = por %p87, %p88
      %p90 = scmp.ne.s32.totalorder %s82, %s84
      %p91 = scmp.eq.s32.totalorder %s18, 1
      %p92 = por %p90, %p91
      %p93 = scmp.ne.s32.totalorder %s84, %s85
      %p94 = scmp.eq.s32.totalorder %s18, 0
      %p95 = por %p93, %p94
      %p96 = scmp.ne.s32.totalorder %s84, %s85
      %p97 = scmp.eq.s32.totalorder %s19, 1
      %p98 = por %p96, %p97
      %p100 = scmp.ne.s32.totalorder %s85, %s99
      %p101 = scmp.eq.s32.totalorder %s19, 0
      %p102 = por %p100, %p101
      %s104 = sadd.s32 %s103, 1
      %p107 = scmp.eq.s32.totalorder %s13, 1
      %p108 = scmp.ne.s32.totalorder %s103, %s105
      %p109 = scmp.eq.s32.totalorder %s13, 0
      %p110 = por %p108, %p109
      %p111 = scmp.ne.s32.totalorder %s103, %s105
      %p112 = scmp.eq.s32.totalorder %s18, 1
      %p113 = por %p111, %p112
      %p114 = scmp.ne.s32.totalorder %s105, %s106
      %p115 = scmp.eq.s32.totalorder %s18, 0
      %p116 = por %p114, %p115
      %p117 = scmp.ne.s32.totalorder %s105, %s106
      %p118 = scmp.eq.s32.totalorder %s19, 1
      %p119 = por %p117, %p118
      %p121 = scmp.ne.s32.totalorder %s106, %s120
      %p122 = scmp.eq.s32.totalorder %s19, 0
      %p123 = por %p121, %p122
      %s124 = ssub.s32 %s20, %s32
      %p125 = scmp.eq.s32.totalorder %s124, 0
      %s127 = sadd.s32 %s126, 1
      %s128 = scalar_select %p125, %s126, %s127
      %p131 = pneg %p125
      %p132 = scmp.eq.s32.totalorder %s13, 1
      %p133 = por %p131, %p132
      %p134 = scmp.ne.s32.totalorder %s126, %s129
      %p135 = scmp.eq.s32.totalorder %s13, 0
      %p136 = por %p134, %p135
      %p137 = scmp.ne.s32.totalorder %s126, %s129
      %p138 = scmp.eq.s32.totalorder %s18, 1
      %p139 = por %p137, %p138
      %p140 = scmp.ne.s32.totalorder %s129, %s130
      %p141 = scmp.eq.s32.totalorder %s18, 0
      %p142 = por %p140, %p141
      %p143 = scmp.ne.s32.totalorder %s129, %s130
      %p144 = scmp.eq.s32.totalorder %s19, 1
      %p145 = por %p143, %p144
      %p147 = scmp.ne.s32.totalorder %s130, %s146
      %p148 = scmp.eq.s32.totalorder %s19, 0
      %p149 = por %p147, %p148
      %p150 = scmp.le.s32.totalorder 1, %s13
      %p151 = scmp.lt.s32.totalorder %s13, 3
      %p152 = pnand %p150, %p151
      %p153 = pneg %p152
      // Predicated region
      $region9: #{tpu_custom_call.1} parent=5 // pred_check
        _
      $region10: #{tpu_custom_call.1} parent=5 // pred_check_branch
        %155 = sbr.rel (%p152) target = $region12
      $region11: #{tpu_custom_call.1} parent=5 // pred_region
        %s156 = ssub.s32 %s13, 1
        // Predicated region
        $region13: #{tpu_custom_call.1} parent=11 // pred_check
          %p157 = pneg %p74
        $region14: #{tpu_custom_call.1} parent=11 // pred_check_branch
          %159 = sbr.rel (%p157) target = $region16
        $region15: #{tpu_custom_call.1} parent=11 // pred_region
          _
        $region16: #{tpu_custom_call.1} parent=11 // pred_fallthru
          _
        // Predicated region
        $region17: #{tpu_custom_call.1} parent=11 // pred_check
          %p160 = pneg %p95
        $region18: #{tpu_custom_call.1} parent=11 // pred_check_branch
          %162 = sbr.rel (%p160) target = $region20
        $region19: #{tpu_custom_call.1} parent=11 // pred_region
          _
        $region20: #{tpu_custom_call.1} parent=11 // pred_fallthru
          _
        // Predicated region
        $region21: #{tpu_custom_call.1} parent=11 // pred_check
          %p163 = pneg %p116
        $region22: #{tpu_custom_call.1} parent=11 // pred_check_branch
          %165 = sbr.rel (%p163) target = $region24
        $region23: #{tpu_custom_call.1} parent=11 // pred_region
          _
        $region24: #{tpu_custom_call.1} parent=11 // pred_fallthru
          _
      $region12: #{tpu_custom_call.1} parent=5 // pred_fallthru
        _
      %p166 = scmp.lt.s32.totalorder %s13, 2
      // Predicated region
      $region25: #{tpu_custom_call.1} parent=5 // pred_check
        %p167 = pneg %p166
      $region26: #{tpu_custom_call.1} parent=5 // pred_check_branch
        %169 = sbr.rel (%p167) target = $region28
      $region27: #{tpu_custom_call.1} parent=5 // pred_region
        // Predicated region
        $region29: #{tpu_custom_call.1} parent=27 // pred_check
          %p170 = pneg %p47
        $region30: #{tpu_custom_call.1} parent=27 // pred_check_branch
          %172 = sbr.rel (%p170) target = $region32
        $region31: #{tpu_custom_call.1} parent=27 // pred_region
          %s173 = sand.u32 %s37, 1
          %s174 = scalar_lea.sflag [#allocation5], %s173
          %s175 = sand.u32 %s37, 1
          %s176 = smul.addr %s175, 64
          %s177 = scalar_lea.vmem [#allocation4], %s176
          %s178 = smul.u32 2, %s21
          %180 = vsyncadd %s174, 0
          %s181 = smul.addr %s20, 8
          %s182 = sadd.s32 %s178, %s181
          %s183 = smul.addr %s182, 8
          %s184 = scalar_lea.hbm %s0, %s183
          %s185 = sshll.u32 %s184, 4
          %s186 = int_to_ptr.hbm [resolvable:$true] %s185
          %s187 = sshll.u32 %s177, 4
          %s188 = int_to_ptr.vmem [resolvable:$true] %s187
          %193 = dma.hbm_to_vmem [thread:$0]  %s186, 1024, %s188, %s174, 256, 256, 16
        $region32: #{tpu_custom_call.1} parent=27 // pred_fallthru
          _
      $region28: #{tpu_custom_call.1} parent=5 // pred_fallthru
        _
      %p194 = scmp.le.s32.totalorder 1, %s13
      %p195 = scmp.lt.s32.totalorder %s13, 3
      %p196 = pnand %p194, %p195
      %p197 = pneg %p196
      // Predicated region
      $region33: #{tpu_custom_call.1} parent=5 // pred_check
        _
      $region34: #{tpu_custom_call.1} parent=5 // pred_check_branch
        %199 = sbr.rel (%p196) target = $region36
      $region35: #{tpu_custom_call.1} parent=5 // pred_region
        %s200 = ssub.s32 %s13, 1
        %s201 = sand.u32 %s40, 1
        %s202 = scalar_lea.sflag [#allocation5], %s201
        %s203 = sand.u32 %s40, 1
        %s204 = smul.addr %s203, 64
        %s205 = scalar_lea.vmem [#allocation4], %s204
        // Predicated region
        $region37: #{tpu_custom_call.1} parent=35 // pred_check
          %p206 = pneg %p53
        $region38: #{tpu_custom_call.1} parent=35 // pred_check_branch
          %208 = sbr.rel (%p206) target = $region40
        $region39: #{tpu_custom_call.1} parent=35 // pred_region
          %210 = dma.done %s202, 1024
        $region40: #{tpu_custom_call.1} parent=35 // pred_fallthru
          _
        %s211 = sand.u32 %s40, 1
        %s212 = scalar_lea.sflag [#allocation5], %s211
        %s213 = sand.u32 %s40, 1
        %s214 = smul.addr %s213, 64
        %s215 = scalar_lea.vmem [#allocation4], %s214
        %p216 = pneg %p53
        %p217 = pneg %p50
        %p218 = pneg %p74
        %p219 = pneg %p71
        %p220 = pneg %p95
        %p221 = pneg %p92
        %p222 = pneg %p116
        %p223 = pneg %p113
        %p224 = pneg %p142
        %p225 = pneg %p139
        %p226 = scmp.lt.s32.totalorder %s22, 1
        %s227 = scalar_select %p226, %s22, 1
        %s228 = smul.addr %s227, 4
        %s229 = smul.addr %s228, 8
        %s230 = scalar_lea.vmem %s4, %s229
        %s231 = smul.u32 2, %s23
        %p232 = scmp.lt.s32.totalorder %s22, 1
        %s233 = scalar_select %p232, %s22, 1
        %s234 = smul.addr %s233, 4
        %s235 = smul.addr %s234, 8
        %s236 = scalar_lea.vmem %s4, %s235
        %p237 = scmp.eq.s32.totalorder %s23, 0
        // Predicated region
        $region41: #{tpu_custom_call.1} parent=35 // pred_check
          %p238 = pneg %p237
        $region42: #{tpu_custom_call.1} parent=35 // pred_check_branch
          %240 = sbr.rel (%p238) target = $region44
        $region43: #{tpu_custom_call.1} parent=35 // pred_region
          %vm241 = vcmask 7168
          %242 = vst.msk [vmem:[#allocation2] sm:$0xff] %vm241, 0.0
          %243 = vst.msk [vmem:[#allocation2 + $0x8] sm:$0xff] %vm241, 0.0
          %244 = vst.msk [vmem:[#allocation2 + $0x10] sm:$0xff] %vm241, 0.0
          %245 = vst.msk [vmem:[#allocation2 + $0x18] sm:$0xff] %vm241, 0.0
          %246 = vst.msk [vmem:[#allocation3] sm:$0xff] %vm241, 0.0
          %247 = vst.msk [vmem:[#allocation3 + $0x8] sm:$0xff] %vm241, 0.0
          %248 = vst.msk [vmem:[#allocation3 + $0x10] sm:$0xff] %vm241, 0.0
          %249 = vst.msk [vmem:[#allocation3 + $0x18] sm:$0xff] %vm241, 0.0
        $region44: #{tpu_custom_call.1} parent=35 // pred_fallthru
          _
        %v250 = vld [vmem:[%s205] sm:$0xff]
        %v251 = vld [vmem:[%s205 + $0x8] sm:$0xff]
        %v252 = vld [vmem:[%s205 + $0x10] sm:$0xff]
        %v253 = vld [vmem:[%s205 + $0x18] sm:$0xff]
        %v254 = vld [vmem:[%s205 + $0x20] sm:$0xff]
        %v255 = vld [vmem:[%s205 + $0x28] sm:$0xff]
        %v256 = vld [vmem:[%s205 + $0x30] sm:$0xff]
        %v257 = vld [vmem:[%s205 + $0x38] sm:$0xff]
        %v258 = vld [vmem:[#allocation2] sm:$0xff]
        %v259 = vld [vmem:[#allocation2 + $0x8] sm:$0xff]
        %v260 = vld [vmem:[#allocation2 + $0x10] sm:$0xff]
        %v261 = vld [vmem:[#allocation2 + $0x18] sm:$0xff]
        %v262 = vadd.f32 %v250, %v251
        %263 = vadd.xlane.f32.xlu0 %v262
        %v264 = vpop.xlane.xlu0 %263
        %v265 = vadd.f32 %v252, %v253
        %266 = vadd.xlane.f32.xlu0 %v265
        %v267 = vpop.xlane.xlu0 %266
        %v268 = vadd.f32 %v254, %v255
        %269 = vadd.xlane.f32.xlu0 %v268
        %v270 = vpop.xlane.xlu0 %269
        %v271 = vadd.f32 %v256, %v257
        %272 = vadd.xlane.f32.xlu0 %v271
        %v273 = vpop.xlane.xlu0 %272
        %v274 = vadd.f32 %v258, %v264
        %v275 = vadd.f32 %v259, %v267
        %v276 = vadd.f32 %v260, %v270
        %v277 = vadd.f32 %v261, %v273
        %vm278 = vcmask 7168
        %279 = vst.msk [vmem:[#allocation2] sm:$0xff] %vm278, %v274
        %280 = vst.msk [vmem:[#allocation2 + $0x8] sm:$0xff] %vm278, %v275
        %281 = vst.msk [vmem:[#allocation2 + $0x10] sm:$0xff] %vm278, %v276
        %282 = vst.msk [vmem:[#allocation2 + $0x18] sm:$0xff] %vm278, %v277
        %v283 = vld [vmem:[#allocation3] sm:$0xff]
        %v284 = vld [vmem:[#allocation3 + $0x8] sm:$0xff]
        %v285 = vld [vmem:[#allocation3 + $0x10] sm:$0xff]
        %v286 = vld [vmem:[#allocation3 + $0x18] sm:$0xff]
        %v287 = vmul.f32 %v250, %v250
        %v288 = vmul.f32 %v251, %v251
        %v289 = vmul.f32 %v252, %v252
        %v290 = vmul.f32 %v253, %v253
        %v291 = vmul.f32 %v254, %v254
        %v292 = vmul.f32 %v255, %v255
        %v293 = vmul.f32 %v256, %v256
        %v294 = vmul.f32 %v257, %v257
        %v295 = vadd.f32 %v287, %v288
        %296 = vadd.xlane.f32.xlu0 %v295
        %v297 = vpop.xlane.xlu0 %296
        %v298 = vadd.f32 %v289, %v290
        %299 = vadd.xlane.f32.xlu0 %v298
        %v300 = vpop.xlane.xlu0 %299
        %v301 = vadd.f32 %v291, %v292
        %302 = vadd.xlane.f32.xlu0 %v301
        %v303 = vpop.xlane.xlu0 %302
        %v304 = vadd.f32 %v293, %v294
        %305 = vadd.xlane.f32.xlu0 %v304
        %v306 = vpop.xlane.xlu0 %305
        %v307 = vadd.f32 %v283, %v297
        %v308 = vadd.f32 %v284, %v300
        %v309 = vadd.f32 %v285, %v303
        %v310 = vadd.f32 %v286, %v306
        %311 = vst.msk [vmem:[#allocation3] sm:$0xff] %vm278, %v307
        %312 = vst.msk [vmem:[#allocation3 + $0x8] sm:$0xff] %vm278, %v308
        %313 = vst.msk [vmem:[#allocation3 + $0x10] sm:$0xff] %vm278, %v309
        %314 = vst.msk [vmem:[#allocation3 + $0x18] sm:$0xff] %vm278, %v310
        // Predicated region
        $region45: #{tpu_custom_call.1} parent=35 // pred_check
          %p315 = pneg %p237
        $region46: #{tpu_custom_call.1} parent=35 // pred_check_branch
          %317 = sbr.rel (%p315) target = $region48
        $region47: #{tpu_custom_call.1} parent=35 // pred_region
          %v318 = vld [vmem:[%s2] sm:$0xff]
          %v319 = vld [vmem:[%s2 + $0x8] sm:$0xff]
          %v320 = vld [vmem:[#allocation2] sm:$0xff]
          %v321 = vld [vmem:[#allocation2 + $0x8] sm:$0xff]
          %v322 = vld [vmem:[#allocation2 + $0x10] sm:$0xff]
          %v323 = vld [vmem:[#allocation2 + $0x18] sm:$0xff]
          %vm324 = vcmask 261120
          %v326 = vsel %vm324, %v318, 0
          %v329 = vsel %vm324, %v319, 0
          %331 = vmatpush.msra.mxu0 0.0
          %332 = vmatpush.msra.mxu0 0.0
          %333 = vmatpush.msra.mxu0 0.0
          %334 = vmatpush.msra.mxu0 0.0
          %335 = vmatpush.msra.mxu0 0.0
          %336 = vmatpush.msra.mxu0 0.0
          %337 = vmatpush.msra.mxu0 0.0
          %338 = vmatpush.msra.mxu0 0.0
          %339 = vmatpush.msra.mxu0 0.0
          %340 = vmatpush.msra.mxu0 0.0
          %341 = vmatpush.msra.mxu0 0.0
          %342 = vmatpush.msra.mxu0 0.0
          %343 = vmatpush.msra.mxu0 %v323
          %344 = vmatpush.msra.mxu0 %v322
          %345 = vmatpush.msra.mxu0 %v321
          %346 = vmatpush.msra.mxu0 %v320
          %347 = vmatmul.f32.gmra.mxu0 %v326
          %v348 = vpop.f32.mrf.mxu0
          %v349 = vadd.f32 0.0, %v348
          %350 = vmatmul.f32.gmra.mxu0 %v329
          %v351 = vpop.f32.mrf.mxu0
          %v352 = vadd.f32 0.0, %v351
          %353 = vdwg.mxu0
          %v354 = vld [vmem:[#allocation3] sm:$0xff]
          %v355 = vld [vmem:[#allocation3 + $0x8] sm:$0xff]
          %v356 = vld [vmem:[#allocation3 + $0x10] sm:$0xff]
          %v357 = vld [vmem:[#allocation3 + $0x18] sm:$0xff]
          %358 = vmatpush.msra.mxu0 0.0
          %359 = vmatpush.msra.mxu0 0.0
          %360 = vmatpush.msra.mxu0 0.0
          %361 = vmatpush.msra.mxu0 0.0
          %362 = vmatpush.msra.mxu0 0.0
          %363 = vmatpush.msra.mxu0 0.0
          %364 = vmatpush.msra.mxu0 0.0
          %365 = vmatpush.msra.mxu0 0.0
          %366 = vmatpush.msra.mxu0 0.0
          %367 = vmatpush.msra.mxu0 0.0
          %368 = vmatpush.msra.mxu0 0.0
          %369 = vmatpush.msra.mxu0 0.0
          %370 = vmatpush.msra.mxu0 %v357
          %371 = vmatpush.msra.mxu0 %v356
          %372 = vmatpush.msra.mxu0 %v355
          %373 = vmatpush.msra.mxu0 %v354
          %374 = vmatmul.f32.gmra.mxu0 %v326
          %v375 = vpop.f32.mrf.mxu0
          %v376 = vadd.f32 0.0, %v375
          %377 = vmatmul.f32.gmra.mxu0 %v329
          %v378 = vpop.f32.mrf.mxu0
          %v379 = vadd.f32 0.0, %v378
          %380 = vdwg.mxu0
          %v381 = vrcp.pop 512.0
          %v382 = vmul.f32 512.0, %v381
          %v383 = vsub.f32 1.0, %v382
          %v384 = vmul.f32 %v381, %v383
          %v385 = vadd.f32 %v381, %v384
          %vm386 = vweird.f32 %v381
          %v387 = vsel %vm386, %v381, %v385
          %v388 = vmul.f32 %v349, %v387
          %v389 = vmul.f32 %v352, %v387
          %v390 = vmul.f32 %v376, %v387
          %v391 = vmul.f32 %v379, %v387
          %v392 = vmul.f32 %v388, %v388
          %v393 = vmul.f32 %v389, %v389
          %v394 = vsub.f32 %v390, %v392
          %v395 = vsub.f32 %v391, %v393
          %v396 = vmax.f32 %v394, 0.0
          %v397 = vmax.f32 %v395, 0.0
          %v398 = vadd.f32 %v396, 1e-06
          %v399 = vadd.f32 %v397, 1e-06
          %v400 = vrsqrt.pop %v398
          %v401 = vmul.f32 %v400, %v398
          %v402 = vmul.f32 %v401, %v400
          %v403 = vmul.f32 0.5, %v402
          %v404 = vsub.f32 1.5, %v403
          %v405 = vmul.f32 %v400, %v404
          %vm406 = vweird.f32 %v398
          %vm407 = vweird.f32 %v400
          %vm408 = vmor %vm406, %vm407
          %v409 = vsel %vm408, %v400, %v405
          %v410 = vrsqrt.pop %v399
          %v411 = vmul.f32 %v410, %v399
          %v412 = vmul.f32 %v411, %v410
          %v413 = vmul.f32 0.5, %v412
          %v414 = vsub.f32 1.5, %v413
          %v415 = vmul.f32 %v410, %v414
          %vm416 = vweird.f32 %v399
          %vm417 = vweird.f32 %v410
          %vm418 = vmor %vm416, %vm417
          %v419 = vsel %vm418, %v410, %v415
          %v420 = vld [vmem:[%s3] sm:$0xff]
          %v421 = vld [vmem:[%s3 + $0x8] sm:$0xff]
          %v422 = vld [vmem:[%s3 + $0x10] sm:$0xff]
          %v423 = vld [vmem:[%s3 + $0x18] sm:$0xff]
          %vm424 = vcmask 130048
          %v426 = vsel %vm424, %v420, 0
          %v429 = vsel %vm424, %v421, 0
          %v432 = vsel %vm424, %v422, 0
          %v435 = vsel %vm424, %v423, 0
          %437 = vmatpush.msra.mxu0 0.0
          %438 = vmatpush.msra.mxu0 0.0
          %439 = vmatpush.msra.mxu0 0.0
          %440 = vmatpush.msra.mxu0 0.0
          %441 = vmatpush.msra.mxu0 0.0
          %442 = vmatpush.msra.mxu0 0.0
          %443 = vmatpush.msra.mxu0 0.0
          %444 = vmatpush.msra.mxu0 0.0
          %445 = vmatpush.msra.mxu0 0.0
          %446 = vmatpush.msra.mxu0 0.0
          %447 = vmatpush.msra.mxu0 0.0
          %448 = vmatpush.msra.mxu0 0.0
          %449 = vmatpush.msra.mxu0 0.0
          %450 = vmatpush.msra.mxu0 0.0
          %451 = vmatpush.msra.mxu0 %v389
          %452 = vmatpush.msra.mxu0 %v388
          %453 = vmatmul.f32.gmra.mxu0 %v426
          %v454 = vpop.f32.mrf.mxu0
          %v455 = vadd.f32 0.0, %v454
          %456 = vmatmul.f32.gmra.mxu0 %v429
          %v457 = vpop.f32.mrf.mxu0
          %v458 = vadd.f32 0.0, %v457
          %459 = vmatmul.f32.gmra.mxu0 %v432
          %v460 = vpop.f32.mrf.mxu0
          %v461 = vadd.f32 0.0, %v460
          %462 = vmatmul.f32.gmra.mxu0 %v435
          %v463 = vpop.f32.mrf.mxu0
          %v464 = vadd.f32 0.0, %v463
          %465 = vdwg.mxu0
          %466 = vmatpush.msra.mxu0 0.0
          %467 = vmatpush.msra.mxu0 0.0
          %468 = vmatpush.msra.mxu0 0.0
          %469 = vmatpush.msra.mxu0 0.0
          %470 = vmatpush.msra.mxu0 0.0
          %471 = vmatpush.msra.mxu0 0.0
          %472 = vmatpush.msra.mxu0 0.0
          %473 = vmatpush.msra.mxu0 0.0
          %474 = vmatpush.msra.mxu0 0.0
          %475 = vmatpush.msra.mxu0 0.0
          %476 = vmatpush.msra.mxu0 0.0
          %477 = vmatpush.msra.mxu0 0.0
          %478 = vmatpush.msra.mxu0 0.0
          %479 = vmatpush.msra.mxu0 0.0
          %480 = vmatpush.msra.mxu0 %v419
          %481 = vmatpush.msra.mxu0 %v409
          %482 = vmatmul.f32.gmra.mxu0 %v426
          %v483 = vpop.f32.mrf.mxu0
          %v484 = vadd.f32 0.0, %v483
          %485 = vmatmul.f32.gmra.mxu0 %v429
          %v486 = vpop.f32.mrf.mxu0
          %v487 = vadd.f32 0.0, %v486
          %488 = vmatmul.f32.gmra.mxu0 %v432
          %v489 = vpop.f32.mrf.mxu0
          %v490 = vadd.f32 0.0, %v489
          %491 = vmatmul.f32.gmra.mxu0 %v435
          %v492 = vpop.f32.mrf.mxu0
          %v493 = vadd.f32 0.0, %v492
          %494 = vdwg.mxu0
          %v495 = vld [vmem:[%s1] sm:$0xff]
          %v496 = vld [vmem:[%s1 + $0x8] sm:$0xff]
          %v497 = vld [vmem:[%s1 + $0x10] sm:$0xff]
          %v498 = vld [vmem:[%s1 + $0x18] sm:$0xff]
          %v499 = vmul.f32 %v484, %v495
          %v500 = vmul.f32 %v487, %v496
          %v501 = vmul.f32 %v490, %v497
          %v502 = vmul.f32 %v493, %v498
          %v503 = vmul.f32 %v455, %v499
          %v504 = vmul.f32 %v458, %v500
          %v505 = vmul.f32 %v461, %v501
          %v506 = vmul.f32 %v464, %v502
          %511 = vrot.lane.b32.xlu0 %v503, 1
          %v512 = vpop.permute.xlu0 %511
          %513 = vrot.lane.b32.xlu0 %v504, 1
          %v514 = vpop.permute.xlu0 %513
          %515 = vrot.lane.b32.xlu0 %v505, 1
          %v516 = vpop.permute.xlu0 %515
          %517 = vrot.lane.b32.xlu0 %v506, 1
          %v518 = vpop.permute.xlu0 %517
          %v523 = vsub.f32 %v495, %v512
          %v524 = vsub.f32 %v496, %v514
          %v525 = vsub.f32 %v497, %v516
          %v526 = vsub.f32 %v498, %v518
          %527 = vst.msk [vmem:[%s236] sm:$0xff] %vm278, %v499
          %528 = vst.msk [vmem:[%s236 + $0x8] sm:$0xff] %vm278, %v500
          %529 = vst.msk [vmem:[%s236 + $0x10] sm:$0xff] %vm278, %v501
          %530 = vst.msk [vmem:[%s236 + $0x18] sm:$0xff] %vm278, %v502
          %vm531 = vcmask 15368
          %532 = vst.msk [vmem:[%s236] sm:$0xff] %vm531, %v523
          %533 = vst.msk [vmem:[%s236 + $0x8] sm:$0xff] %vm531, %v524
          %534 = vst.msk [vmem:[%s236 + $0x10] sm:$0xff] %vm531, %v525
          %535 = vst.msk [vmem:[%s236 + $0x18] sm:$0xff] %vm531, %v526
        $region48: #{tpu_custom_call.1} parent=35 // pred_fallthru
          _
        %p536 = scmp.lt.s32.totalorder %s22, 1
        %s537 = scalar_select %p536, %s22, 1
        %s538 = smul.addr %s537, 4
        %s539 = smul.addr %s538, 8
        %s540 = scalar_lea.vmem %s4, %s539
        // Predicated region
        $region49: #{tpu_custom_call.1} parent=35 // pred_check
          %p541 = pneg %p139
        $region50: #{tpu_custom_call.1} parent=35 // pred_check_branch
          %543 = sbr.rel (%p541) target = $region52
        $region51: #{tpu_custom_call.1} parent=35 // pred_region
          _
        $region52: #{tpu_custom_call.1} parent=35 // pred_fallthru
          _
      $region36: #{tpu_custom_call.1} parent=5 // pred_fallthru
        _
      %p544 = scmp.le.s32.totalorder 2, %s13
      // Predicated region
      $region53: #{tpu_custom_call.1} parent=5 // pred_check
        %p545 = pneg %p544
      $region54: #{tpu_custom_call.1} parent=5 // pred_check_branch
        %547 = sbr.rel (%p545) target = $region56
      $region55: #{tpu_custom_call.1} parent=5 // pred_region
        %s548 = ssub.s32 %s13, 2
        // Predicated region
        $region57: #{tpu_custom_call.1} parent=55 // pred_check
          %p549 = pneg %p145
        $region58: #{tpu_custom_call.1} parent=55 // pred_check_branch
          %551 = sbr.rel (%p549) target = $region60
        $region59: #{tpu_custom_call.1} parent=55 // pred_region
          %p552 = scmp.lt.s32.totalorder %s24, 1
          %s553 = scalar_select %p552, %s24, 1
          %s554 = smul.addr %s553, 4
          %s555 = smul.addr %s554, 8
          %s556 = scalar_lea.vmem %s4, %s555
        $region60: #{tpu_custom_call.1} parent=55 // pred_fallthru
          _
      $region56: #{tpu_custom_call.1} parent=5 // pred_fallthru
        _
    $region6: #{tpu_custom_call.1} parent=1 // loop_footer
      %s17 = sadd.s32 1, %s13
    $region7: #{tpu_custom_call.1} parent=1 // loop_footer_branch
      %12 = sbr.rel target = $region3
    $region8: #{tpu_custom_call.1} parent=1 // loop_exit
      _
    %557 = vsyncpa [#allocation5], 1
    %s558 = scalar_lea.sflag [#allocation5], 1
    %559 = vsyncpa %s558, 1

</llo_original>
